<compile_context>
chip_gen: v7x
topology: tpu7x:2x2x1
jax: 0.10.0
libtpu: 0.0.40
codegen_flags: <defaults>
</compile_context>

<pallas_src>
import jax
import jax.numpy as jnp
from jax.experimental import pallas as pl
from jax.experimental.pallas import tpu as pltpu

OUT_LANES = 128  # lane-dense padded width for the 2-wide final layer


def mlp_kernel(x_ref,
               w1_ref, b1_ref,
               w2_ref, b2_ref,
               w3_ref, b3_ref,
               w4_ref, b4_ref,
               o_ref):
    # 4 MXU matmuls (bf16 x bf16 -> f32 accumulate) + 3 ReLUs, fully fused per
    # batch tile. Weights/biases live in VMEM once (single-buffered blocks).
    x = x_ref[...]                                                        # bf16
    h = jnp.dot(x, w1_ref[...], preferred_element_type=jnp.float32) + b1_ref[...]
    h = jnp.maximum(h, 0.0).astype(jnp.bfloat16)
    h = jnp.dot(h, w2_ref[...], preferred_element_type=jnp.float32) + b2_ref[...]
    h = jnp.maximum(h, 0.0).astype(jnp.bfloat16)
    h = jnp.dot(h, w3_ref[...], preferred_element_type=jnp.float32) + b3_ref[...]
    h = jnp.maximum(h, 0.0).astype(jnp.bfloat16)
    out = jnp.dot(h, w4_ref[...], preferred_element_type=jnp.float32) + b4_ref[...]
    o_ref[...] = out.astype(o_ref.dtype)                  # lane-dense f32 store


def _round_up(n, m):
    return (n + m - 1) // m * m


def mlp_forward(x, params, *, batch_tile=512):
    """x: [B, inputSize] float32. params: {name: (w [in,out] f32, b [1,out] f32)}."""
    B, in_dim = x.shape
    (w1, b1), (w2, b2), (w3, b3), (w4, b4) = (
        params["l1"], params["l2"], params["l3"], params["l4"])
    out_dim = w4.shape[1]

    # Lane-dense output: pad last layer to 128 zero-filled columns, slice after.
    w4p = jnp.zeros((w4.shape[0], OUT_LANES), w4.dtype).at[:, :out_dim].set(w4)
    b4p = jnp.zeros((1, OUT_LANES), b4.dtype).at[:, :out_dim].set(b4)

    # bf16 operands for the MXU; accumulation stays f32 inside the kernel.
    xb = x.astype(jnp.bfloat16)
    w1b = w1.astype(jnp.bfloat16)
    w2b = w2.astype(jnp.bfloat16)
    w3b = w3.astype(jnp.bfloat16)
    w4b = w4p.astype(jnp.bfloat16)

    # Batch tiling: one MXU-aligned tile per grid step.
    #  - small batches: single grid step covering the (8-rounded) batch
    #  - large batches: `batch_tile` rows per step (multiple of 256 for the
    #    v6e/v7x MXU; sweep 256/512/1024, cap against v7x's 64 MiB VMEM).
    if B <= batch_tile:
        tile = _round_up(B, 8)
    else:
        tile = batch_tile
    B_pad = _round_up(B, tile)
    if B_pad != B:
        xb = jnp.pad(xb, ((0, B_pad - B), (0, 0)))
    grid = (B_pad // tile,)

    def const_spec(arr):
        # Grid-invariant block: fetched once, kept in a single VMEM buffer.
        return pl.BlockSpec(arr.shape, lambda i: (0, 0),
                            pipeline_mode=pl.Buffered(1))

    out = pl.pallas_call(
        mlp_kernel,
        out_shape=jax.ShapeDtypeStruct((B_pad, OUT_LANES), jnp.float32),
        grid=grid,
        in_specs=[
            pl.BlockSpec((tile, in_dim), lambda i: (i, 0)),
            const_spec(w1b), const_spec(b1),
            const_spec(w2b), const_spec(b2),
            const_spec(w3b), const_spec(b3),
            const_spec(w4b), const_spec(b4p),
        ],
        out_specs=pl.BlockSpec((tile, OUT_LANES), lambda i: (i, 0)),
        compiler_params=pltpu.CompilerParams(
            dimension_semantics=("parallel",)),
    )(xb, w1b, b1, w2b, b2, w3b, b3, w4b, b4p)

    return out[:B, :out_dim]


def init_params(key, input_size):
    """Deterministic init mimicking torch.nn.Linear default (U[-1/sqrt(fan_in), +])."""
    dims = [(input_size, 256), (256, 64), (64, 32), (32, 2)]
    names = ["l1", "l2", "l3", "l4"]
    params = {}
    for name, (fan_in, fan_out) in zip(names, dims):
        key, kw, kb = jax.random.split(key, 3)
        bound = 1.0 / jnp.sqrt(float(fan_in))
        # stored as [in, out] (transposed vs PyTorch's [out, in])
        w = jax.random.uniform(kw, (fan_in, fan_out), jnp.float32, -bound, bound)
        b = jax.random.uniform(kb, (1, fan_out), jnp.float32, -bound, bound)
        params[name] = (w, b)
    return params


def mlp_reference(x, params):
    """Plain-JAX reference at matching precision (bf16 operands, f32 accum)."""
    def dense(h, w, b):
        return jnp.dot(h.astype(jnp.bfloat16), w.astype(jnp.bfloat16),
                       preferred_element_type=jnp.float32) + b
    (w1, b1), (w2, b2), (w3, b3), (w4, b4) = (
        params["l1"], params["l2"], params["l3"], params["l4"])
    h = jnp.maximum(dense(x, w1, b1), 0.0)
    h = jnp.maximum(dense(h, w2, b2), 0.0)
    h = jnp.maximum(dense(h, w3, b3), 0.0)
    return dense(h, w4, b4)


if __name__ == "__main__":
    key = jax.random.PRNGKey(0)
    key, kx1, kx2 = jax.random.split(key, 3)

    input_size = 32
    params = init_params(key, input_size)

    # Small demo batch: single grid step, whole batch in one block.
    x_small = jax.random.normal(kx1, (16, input_size), jnp.float32)
    out_small = jax.block_until_ready(mlp_forward(x_small, params))
    ref_small = mlp_reference(x_small, params)
    assert out_small.shape == (16, 2)
    assert jnp.allclose(out_small, ref_small, atol=2e-2, rtol=2e-2)

    # Larger batch: exercises MXU-aligned 512-row tiles (grid=(2,), parallel).
    x_big = jax.random.normal(kx2, (1024, input_size), jnp.float32)
    out_big = jax.block_until_ready(mlp_forward(x_big, params))
    ref_big = mlp_reference(x_big, params)
    assert out_big.shape == (1024, 2)
    assert jnp.allclose(out_big, ref_big, atol=2e-2, rtol=2e-2)

    print("KERNEL_OK")
</pallas_src>

<mosaic_0001>
module attributes {stable_mosaic.version = 11 : i64} {
  func.func @mlp_kernel(%arg0: i32, %arg1: memref<16x32xbf16, #tpu.memory_space<vmem>>, %arg2: memref<32x256xbf16, #tpu.memory_space<vmem>>, %arg3: memref<1x256xf32, #tpu.memory_space<vmem>>, %arg4: memref<256x64xbf16, #tpu.memory_space<vmem>>, %arg5: memref<1x64xf32, #tpu.memory_space<vmem>>, %arg6: memref<64x32xbf16, #tpu.memory_space<vmem>>, %arg7: memref<1x32xf32, #tpu.memory_space<vmem>>, %arg8: memref<32x128xbf16, #tpu.memory_space<vmem>>, %arg9: memref<1x128xf32, #tpu.memory_space<vmem>>, %arg10: memref<16x128xf32, #tpu.memory_space<vmem>>) attributes {dimension_semantics = [#tpu.dimension_semantics<parallel>], iteration_bounds = array<i64: 1>, scalar_prefetch = 0 : i64, scratch_operands = 0 : i64, tpu.core_type = #tpu.core_type<tc>, window_params = [{transform_indices = @transform_0, window_bounds = array<i64: 16, 32>}, {pipeline_mode = #tpu.pipeline_mode<synchronous>, transform_indices = @transform_1, window_bounds = array<i64: 32, 256>}, {pipeline_mode = #tpu.pipeline_mode<synchronous>, transform_indices = @transform_2, window_bounds = array<i64: 1, 256>}, {pipeline_mode = #tpu.pipeline_mode<synchronous>, transform_indices = @transform_3, window_bounds = array<i64: 256, 64>}, {pipeline_mode = #tpu.pipeline_mode<synchronous>, transform_indices = @transform_4, window_bounds = array<i64: 1, 64>}, {pipeline_mode = #tpu.pipeline_mode<synchronous>, transform_indices = @transform_5, window_bounds = array<i64: 64, 32>}, {pipeline_mode = #tpu.pipeline_mode<synchronous>, transform_indices = @transform_6, window_bounds = array<i64: 1, 32>}, {pipeline_mode = #tpu.pipeline_mode<synchronous>, transform_indices = @transform_7, window_bounds = array<i64: 32, 128>}, {pipeline_mode = #tpu.pipeline_mode<synchronous>, transform_indices = @transform_8, window_bounds = array<i64: 1, 128>}, {transform_indices = @transform_9, window_bounds = array<i64: 16, 128>}]} {
    %c0 = arith.constant 0 : index
    %c0_0 = arith.constant 0 : index
    %0 = vector.load %arg1[%c0, %c0_0] : memref<16x32xbf16, #tpu.memory_space<vmem>>, vector<16x32xbf16>
    %c0_1 = arith.constant 0 : index
    %c0_2 = arith.constant 0 : index
    %1 = vector.load %arg2[%c0_1, %c0_2] : memref<32x256xbf16, #tpu.memory_space<vmem>>, vector<32x256xbf16>
    %cst = arith.constant dense<0.000000e+00> : vector<16x256xf32>
    %2 = tpu.matmul %0, %1, %cst {dimension_numbers = #tpu.dot_dimension_numbers<[1], [0], [0], [1], [0, 0, 1, 1], [], []>} : vector<16x32xbf16>, vector<32x256xbf16>, vector<16x256xf32> -> vector<16x256xf32>
    %c0_3 = arith.constant 0 : index
    %c0_4 = arith.constant 0 : index
    %3 = vector.load %arg3[%c0_3, %c0_4] : memref<1x256xf32, #tpu.memory_space<vmem>>, vector<1x256xf32>
    %4 = vector.broadcast %3 : vector<1x256xf32> to vector<16x256xf32>
    %5 = arith.addf %2, %4 : vector<16x256xf32>
    %cst_5 = arith.constant 0.000000e+00 : f32
    %6 = vector.broadcast %cst_5 : f32 to vector<16x256xf32>
    %7 = arith.maximumf %5, %6 : vector<16x256xf32>
    %8 = arith.truncf %7 : vector<16x256xf32> to vector<16x256xbf16>
    %c0_6 = arith.constant 0 : index
    %c0_7 = arith.constant 0 : index
    %9 = vector.load %arg4[%c0_6, %c0_7] : memref<256x64xbf16, #tpu.memory_space<vmem>>, vector<256x64xbf16>
    %cst_8 = arith.constant dense<0.000000e+00> : vector<16x64xf32>
    %10 = tpu.matmul %8, %9, %cst_8 {dimension_numbers = #tpu.dot_dimension_numbers<[1], [0], [0], [1], [0, 0, 1, 1], [], []>} : vector<16x256xbf16>, vector<256x64xbf16>, vector<16x64xf32> -> vector<16x64xf32>
    %c0_9 = arith.constant 0 : index
    %c0_10 = arith.constant 0 : index
    %11 = vector.load %arg5[%c0_9, %c0_10] : memref<1x64xf32, #tpu.memory_space<vmem>>, vector<1x64xf32>
    %12 = vector.broadcast %11 : vector<1x64xf32> to vector<16x64xf32>
    %13 = arith.addf %10, %12 : vector<16x64xf32>
    %cst_11 = arith.constant 0.000000e+00 : f32
    %14 = vector.broadcast %cst_11 : f32 to vector<16x64xf32>
    %15 = arith.maximumf %13, %14 : vector<16x64xf32>
    %16 = arith.truncf %15 : vector<16x64xf32> to vector<16x64xbf16>
    %c0_12 = arith.constant 0 : index
    %c0_13 = arith.constant 0 : index
    %17 = vector.load %arg6[%c0_12, %c0_13] : memref<64x32xbf16, #tpu.memory_space<vmem>>, vector<64x32xbf16>
    %cst_14 = arith.constant dense<0.000000e+00> : vector<16x32xf32>
    %18 = tpu.matmul %16, %17, %cst_14 {dimension_numbers = #tpu.dot_dimension_numbers<[1], [0], [0], [1], [0, 0, 1, 1], [], []>} : vector<16x64xbf16>, vector<64x32xbf16>, vector<16x32xf32> -> vector<16x32xf32>
    %c0_15 = arith.constant 0 : index
    %c0_16 = arith.constant 0 : index
    %19 = vector.load %arg7[%c0_15, %c0_16] : memref<1x32xf32, #tpu.memory_space<vmem>>, vector<1x32xf32>
    %20 = vector.broadcast %19 : vector<1x32xf32> to vector<16x32xf32>
    %21 = arith.addf %18, %20 : vector<16x32xf32>
    %cst_17 = arith.constant 0.000000e+00 : f32
    %22 = vector.broadcast %cst_17 : f32 to vector<16x32xf32>
    %23 = arith.maximumf %21, %22 : vector<16x32xf32>
    %24 = arith.truncf %23 : vector<16x32xf32> to vector<16x32xbf16>
    %c0_18 = arith.constant 0 : index
    %c0_19 = arith.constant 0 : index
    %25 = vector.load %arg8[%c0_18, %c0_19] : memref<32x128xbf16, #tpu.memory_space<vmem>>, vector<32x128xbf16>
    %cst_20 = arith.constant dense<0.000000e+00> : vector<16x128xf32>
    %26 = tpu.matmul %24, %25, %cst_20 {dimension_numbers = #tpu.dot_dimension_numbers<[1], [0], [0], [1], [0, 0, 1, 1], [], []>} : vector<16x32xbf16>, vector<32x128xbf16>, vector<16x128xf32> -> vector<16x128xf32>
    %c0_21 = arith.constant 0 : index
    %c0_22 = arith.constant 0 : index
    %27 = vector.load %arg9[%c0_21, %c0_22] : memref<1x128xf32, #tpu.memory_space<vmem>>, vector<1x128xf32>
    %28 = vector.broadcast %27 : vector<1x128xf32> to vector<16x128xf32>
    %29 = arith.addf %26, %28 : vector<16x128xf32>
    %c0_23 = arith.constant 0 : index
    %c0_24 = arith.constant 0 : index
    %30 = vector.load %arg10[%c0_23, %c0_24] : memref<16x128xf32, #tpu.memory_space<vmem>>, vector<16x128xf32>
    tpu.vector_store %arg10[%c0_23, %c0_24], %29 {strides = array<i32>} : memref<16x128xf32, #tpu.memory_space<vmem>>, vector<16x128xf32>,
    return
  }
  func.func @transform_0(%arg0: i32) -> (i32, i32) {
    %c0_i32 = arith.constant 0 : i32
    %c0_i32_0 = arith.constant 0 : i32
    return %arg0, %c0_i32 : i32, i32
  }
  func.func @transform_1(%arg0: i32) -> (i32, i32) {
    %c0_i32 = arith.constant 0 : i32
    %c0_i32_0 = arith.constant 0 : i32
    %c0_i32_1 = arith.constant 0 : i32
    return %c0_i32, %c0_i32_0 : i32, i32
  }
  func.func @transform_2(%arg0: i32) -> (i32, i32) {
    %c0_i32 = arith.constant 0 : i32
    %c0_i32_0 = arith.constant 0 : i32
    %c0_i32_1 = arith.constant 0 : i32
    return %c0_i32, %c0_i32_0 : i32, i32
  }
  func.func @transform_3(%arg0: i32) -> (i32, i32) {
    %c0_i32 = arith.constant 0 : i32
    %c0_i32_0 = arith.constant 0 : i32
    %c0_i32_1 = arith.constant 0 : i32
    return %c0_i32, %c0_i32_0 : i32, i32
  }
  func.func @transform_4(%arg0: i32) -> (i32, i32) {
    %c0_i32 = arith.constant 0 : i32
    %c0_i32_0 = arith.constant 0 : i32
    %c0_i32_1 = arith.constant 0 : i32
    return %c0_i32, %c0_i32_0 : i32, i32
  }
  func.func @transform_5(%arg0: i32) -> (i32, i32) {
    %c0_i32 = arith.constant 0 : i32
    %c0_i32_0 = arith.constant 0 : i32
    %c0_i32_1 = arith.constant 0 : i32
    return %c0_i32, %c0_i32_0 : i32, i32
  }
  func.func @transform_6(%arg0: i32) -> (i32, i32) {
    %c0_i32 = arith.constant 0 : i32
    %c0_i32_0 = arith.constant 0 : i32
    %c0_i32_1 = arith.constant 0 : i32
    return %c0_i32, %c0_i32_0 : i32, i32
  }
  func.func @transform_7(%arg0: i32) -> (i32, i32) {
    %c0_i32 = arith.constant 0 : i32
    %c0_i32_0 = arith.constant 0 : i32
    %c0_i32_1 = arith.constant 0 : i32
    return %c0_i32, %c0_i32_0 : i32, i32
  }
  func.func @transform_8(%arg0: i32) -> (i32, i32) {
    %c0_i32 = arith.constant 0 : i32
    %c0_i32_0 = arith.constant 0 : i32
    %c0_i32_1 = arith.constant 0 : i32
    return %c0_i32, %c0_i32_0 : i32, i32
  }
  func.func @transform_9(%arg0: i32) -> (i32, i32) {
    %c0_i32 = arith.constant 0 : i32
    %c0_i32_0 = arith.constant 0 : i32
    return %arg0, %c0_i32 : i32, i32
  }
}

</mosaic_0001>

<llo_original>
// kernel: tpu_custom_call.1
$region0: #{tpu_custom_call.1}
  #allocation0 [shape = 'u32[]', space=smem, size = 0x4, offset = 0x4, fixed_abs, tag = 'smem constant byte address 0x4 - core index']
  #allocation1 [shape = 'u32[144,128]{1,0:T(1,128)}', space=vmem, size = 0x12000, scoped, tag = 'internal scratch']
  %s0 = inlined_call_operand.vmem [shape: bf16[16,32], index: 0, kind: input, shape index: {}]
  %s1 = inlined_call_operand.vmem [shape: bf16[32,256], index: 1, kind: input, shape index: {}]
  %s2 = inlined_call_operand.vmem [shape: f32[1,256], index: 2, kind: input, shape index: {}]
  %s3 = inlined_call_operand.vmem [shape: bf16[256,64], index: 3, kind: input, shape index: {}]
  %s4 = inlined_call_operand.vmem [shape: f32[1,64], index: 4, kind: input, shape index: {}]
  %s5 = inlined_call_operand.vmem [shape: bf16[64,32], index: 5, kind: input, shape index: {}]
  %s6 = inlined_call_operand.vmem [shape: f32[1,32], index: 6, kind: input, shape index: {}]
  %s7 = inlined_call_operand.vmem [shape: bf16[32,128], index: 7, kind: input, shape index: {}]
  %s8 = inlined_call_operand.vmem [shape: f32[1,128], index: 8, kind: input, shape index: {}]
  %s9 = inlined_call_operand.hbm [shape: f32[16,128], index: 9, kind: output, shape index: {}]
  %s10 = sld [smem:[#allocation0]]
  $region46: #{tpu_custom_call.1} parent=0
    _
  %s12 = ssub.s32 1, %s10
  %s13 = scalar_select 0, %s12, %s10
  $region1: #{tpu_custom_call.1} parent=0
    #allocation2 [shape = 'u8[8192]{0}', space=vmem, size = 0x2000, scoped, tag = 'output window, operand 0, single buffered']
    #allocation3 [shape = 's32[1]{0}', space=sflag, size = 0x4, scoped, tag = 'scoped memory for tpu_custom_call.1']
    %14 = vsyncpa [#allocation3], 0
    // Predicated region
    $region2: #{tpu_custom_call.1} parent=1 // pred_check
      _
    $region3: #{tpu_custom_call.1} parent=1 // pred_check_branch
      %16 = sbr.rel (0) target = $region5
    $region4: #{tpu_custom_call.1} parent=1 // pred_region
      _
    $region5: #{tpu_custom_call.1} parent=1 // pred_fallthru
      _
    // Predicated region
    $region6: #{tpu_custom_call.1} parent=1 // pred_check
      _
    $region7: #{tpu_custom_call.1} parent=1 // pred_check_branch
      %18 = sbr.rel (0) target = $region9
    $region8: #{tpu_custom_call.1} parent=1 // pred_region
      _
    $region9: #{tpu_custom_call.1} parent=1 // pred_fallthru
      _
    // Predicated region
    $region10: #{tpu_custom_call.1} parent=1 // pred_check
      _
    $region11: #{tpu_custom_call.1} parent=1 // pred_check_branch
      %20 = sbr.rel (0) target = $region13
    $region12: #{tpu_custom_call.1} parent=1 // pred_region
      _
    $region13: #{tpu_custom_call.1} parent=1 // pred_fallthru
      _
    // Predicated region
    $region14: #{tpu_custom_call.1} parent=1 // pred_check
      _
    $region15: #{tpu_custom_call.1} parent=1 // pred_check_branch
      %22 = sbr.rel (0) target = $region17
    $region16: #{tpu_custom_call.1} parent=1 // pred_region
      _
    $region17: #{tpu_custom_call.1} parent=1 // pred_fallthru
      _
    // Predicated region
    $region18: #{tpu_custom_call.1} parent=1 // pred_check
      _
    $region19: #{tpu_custom_call.1} parent=1 // pred_check_branch
      %24 = sbr.rel (0) target = $region21
    $region20: #{tpu_custom_call.1} parent=1 // pred_region
      _
    $region21: #{tpu_custom_call.1} parent=1 // pred_fallthru
      _
    // Predicated region
    $region22: #{tpu_custom_call.1} parent=1 // pred_check
      _
    $region23: #{tpu_custom_call.1} parent=1 // pred_check_branch
      %26 = sbr.rel (0) target = $region25
    $region24: #{tpu_custom_call.1} parent=1 // pred_region
      _
    $region25: #{tpu_custom_call.1} parent=1 // pred_fallthru
      _
    // Predicated region
    $region26: #{tpu_custom_call.1} parent=1 // pred_check
      _
    $region27: #{tpu_custom_call.1} parent=1 // pred_check_branch
      %28 = sbr.rel (0) target = $region29
    $region28: #{tpu_custom_call.1} parent=1 // pred_region
      _
    $region29: #{tpu_custom_call.1} parent=1 // pred_fallthru
      _
    // Predicated region
    $region30: #{tpu_custom_call.1} parent=1 // pred_check
      _
    $region31: #{tpu_custom_call.1} parent=1 // pred_check_branch
      %30 = sbr.rel (0) target = $region33
    $region32: #{tpu_custom_call.1} parent=1 // pred_region
      _
    $region33: #{tpu_custom_call.1} parent=1 // pred_fallthru
      _
    // Predicated region
    $region34: #{tpu_custom_call.1} parent=1 // pred_check
      _
    $region35: #{tpu_custom_call.1} parent=1 // pred_check_branch
      %32 = sbr.rel (0) target = $region37
    $region36: #{tpu_custom_call.1} parent=1 // pred_region
      _
    $region37: #{tpu_custom_call.1} parent=1 // pred_fallthru
      _
    %v34 = vld [vmem:[%s0] sm:$0xf]
    %v35 = vld [vmem:[%s0 + $0x4] sm:$0xf]
    %v36 = vld [vmem:[%s1] sm:$0xff]
    %v37 = vld [vmem:[%s1 + $0x8] sm:$0xff]
    %v38 = vld [vmem:[%s1 + $0x10] sm:$0xff]
    %v39 = vld [vmem:[%s1 + $0x18] sm:$0xff]
    %v40 = vld [vmem:[%s2] sm:$0x3]
    %v42 = vlaneseq
    %v43 = vshrl.u32 %v42, 7
    %v44 = vsub.s32 0, %v43
    %v45 = vrot.slane %v40, %v44
    %v46 = vlaneseq
    %v47 = vshrl.u32 %v46, 7
    %v48 = vsub.s32 1, %v47
    %v49 = vrot.slane %v40, %v48
    %v54 = vunpack.c.l.b16 %v34
    %v55 = vunpack.c.l.b16 %v35
    %v56 = vpack.c.b16 %v55, %v54
    %v61 = vunpack.c.l.b16 %v36
    %v62 = vunpack.c.h.b16 %v36
    %v63 = vunpack.c.l.b16 %v37
    %v64 = vunpack.c.h.b16 %v37
    %v65 = vunpack.c.l.b16 %v38
    %v66 = vunpack.c.h.b16 %v38
    %v67 = vunpack.c.l.b16 %v39
    %v68 = vunpack.c.h.b16 %v39
    %v69 = vpack.c.b16 %v63, %v61
    %v70 = vpack.c.b16 %v64, %v62
    %v71 = vpack.c.b16 %v67, %v65
    %v72 = vpack.c.b16 %v68, %v66
    %vm77 = vcmask 261120
    %v79 = vsel %vm77, %v56, 0
    %81 = vmatprep.subr.bf16.mxu0 %v70
    %82 = vmatpush1.bf16.msra.mxu0 %v69
    %83 = vmatprep.subr.bf16.mxu0 %v72
    %84 = vmatpush1.bf16.msra.mxu0 %v71
    %85 = vmatprep.subr.bf16.mxu0 0
    %86 = vmatpush1.bf16.msra.mxu0 0
    %87 = vmatprep.subr.bf16.mxu0 0
    %88 = vmatpush1.bf16.msra.mxu0 0
    %89 = vmatprep.subr.bf16.mxu0 0
    %90 = vmatpush1.bf16.msra.mxu0 0
    %91 = vmatprep.subr.bf16.mxu0 0
    %92 = vmatpush1.bf16.msra.mxu0 0
    %93 = vmatprep.subr.bf16.mxu0 0
    %94 = vmatpush1.bf16.msra.mxu0 0
    %95 = vmatprep.subr.bf16.mxu0 0
    %96 = vmatpush1.bf16.msra.mxu0 0
    %97 = vmatprep.subr.bf16.mxu0 0
    %98 = vmatpush1.bf16.msra.mxu0 0
    %99 = vmatprep.subr.bf16.mxu0 0
    %100 = vmatpush1.bf16.msra.mxu0 0
    %101 = vmatprep.subr.bf16.mxu0 0
    %102 = vmatpush1.bf16.msra.mxu0 0
    %103 = vmatprep.subr.bf16.mxu0 0
    %104 = vmatpush1.bf16.msra.mxu0 0
    %105 = vmatprep.subr.bf16.mxu0 0
    %106 = vmatpush1.bf16.msra.mxu0 0
    %107 = vmatprep.subr.bf16.mxu0 0
    %108 = vmatpush1.bf16.msra.mxu0 0
    %109 = vmatprep.subr.bf16.mxu0 0
    %110 = vmatpush1.bf16.msra.mxu0 0
    %111 = vmatprep.subr.bf16.mxu0 0
    %112 = vmatpush1.bf16.msra.mxu0 0
    %113 = vmatprep.mubr.bf16.mxu0 0
    %114 = vmatmul.mubr.bf16.gmra.mrb[0].mxu0 %v79
    %v115 = vpop.f32.mrb[0].mxu0
    %v116 = vadd.f32 %v45, %v115
    %v117 = vpop.f32.mrb[0].mxu0
    %v118 = vadd.f32 %v49, %v117
    %v119 = vpop.f32.mrb[0].mxu0
    %v120 = vadd.f32 %v45, %v119
    %v121 = vpop.f32.mrb[0].mxu0
    %v122 = vadd.f32 %v49, %v121
    %123 = vdwg.mxu0
    %v124 = vmax.f32 %v116, 0.0
    %v125 = vmax.f32 %v118, 0.0
    %v126 = vmax.f32 %v120, 0.0
    %v127 = vmax.f32 %v122, 0.0
    %v128 = vpack.c.bf16 %v126, %v124
    %v129 = vpack.c.bf16 %v127, %v125
    %v130 = vld [vmem:[%s3] sm:$0xf]
    %v131 = vld [vmem:[%s3 + $0x4] sm:$0xf]
    %v132 = vld [vmem:[%s3 + $0x8] sm:$0xf]
    %v133 = vld [vmem:[%s3 + $0xc] sm:$0xf]
    %v134 = vld [vmem:[%s3 + $0x10] sm:$0xf]
    %v135 = vld [vmem:[%s3 + $0x14] sm:$0xf]
    %v136 = vld [vmem:[%s3 + $0x18] sm:$0xf]
    %v137 = vld [vmem:[%s3 + $0x1c] sm:$0xf]
    %v138 = vld [vmem:[%s3 + $0x20] sm:$0xf]
    %v139 = vld [vmem:[%s3 + $0x24] sm:$0xf]
    %v140 = vld [vmem:[%s3 + $0x28] sm:$0xf]
    %v141 = vld [vmem:[%s3 + $0x2c] sm:$0xf]
    %v142 = vld [vmem:[%s3 + $0x30] sm:$0xf]
    %v143 = vld [vmem:[%s3 + $0x34] sm:$0xf]
    %v144 = vld [vmem:[%s3 + $0x38] sm:$0xf]
    %v145 = vld [vmem:[%s3 + $0x3c] sm:$0xf]
    %v146 = vld [vmem:[%s3 + $0x40] sm:$0xf]
    %v147 = vld [vmem:[%s3 + $0x44] sm:$0xf]
    %v148 = vld [vmem:[%s3 + $0x48] sm:$0xf]
    %v149 = vld [vmem:[%s3 + $0x4c] sm:$0xf]
    %v150 = vld [vmem:[%s3 + $0x50] sm:$0xf]
    %v151 = vld [vmem:[%s3 + $0x54] sm:$0xf]
    %v152 = vld [vmem:[%s3 + $0x58] sm:$0xf]
    %v153 = vld [vmem:[%s3 + $0x5c] sm:$0xf]
    %v154 = vld [vmem:[%s3 + $0x60] sm:$0xf]
    %v155 = vld [vmem:[%s3 + $0x64] sm:$0xf]
    %v156 = vld [vmem:[%s3 + $0x68] sm:$0xf]
    %v157 = vld [vmem:[%s3 + $0x6c] sm:$0xf]
    %v158 = vld [vmem:[%s3 + $0x70] sm:$0xf]
    %v159 = vld [vmem:[%s3 + $0x74] sm:$0xf]
    %v160 = vld [vmem:[%s3 + $0x78] sm:$0xf]
    %v161 = vld [vmem:[%s3 + $0x7c] sm:$0xf]
    %v162 = vld [vmem:[%s4] sm:$0x1]
    %v164 = vlaneseq
    %v165 = vshrl.u32 %v164, 7
    %v166 = vsub.s32 0, %v165
    %v167 = vrot.slane %v162, %v166
    %v201 = vunpack.c.l.b16 %v130
    %v202 = vunpack.c.l.b16 %v131
    %v203 = vunpack.c.l.b16 %v132
    %v204 = vunpack.c.l.b16 %v133
    %v205 = vunpack.c.l.b16 %v134
    %v206 = vunpack.c.l.b16 %v135
    %v207 = vunpack.c.l.b16 %v136
    %v208 = vunpack.c.l.b16 %v137
    %v209 = vunpack.c.l.b16 %v138
    %v210 = vunpack.c.l.b16 %v139
    %v211 = vunpack.c.l.b16 %v140
    %v212 = vunpack.c.l.b16 %v141
    %v213 = vunpack.c.l.b16 %v142
    %v214 = vunpack.c.l.b16 %v143
    %v215 = vunpack.c.l.b16 %v144
    %v216 = vunpack.c.l.b16 %v145
    %v217 = vunpack.c.l.b16 %v146
    %v218 = vunpack.c.l.b16 %v147
    %v219 = vunpack.c.l.b16 %v148
    %v220 = vunpack.c.l.b16 %v149
    %v221 = vunpack.c.l.b16 %v150
    %v222 = vunpack.c.l.b16 %v151
    %v223 = vunpack.c.l.b16 %v152
    %v224 = vunpack.c.l.b16 %v153
    %v225 = vunpack.c.l.b16 %v154
    %v226 = vunpack.c.l.b16 %v155
    %v227 = vunpack.c.l.b16 %v156
    %v228 = vunpack.c.l.b16 %v157
    %v229 = vunpack.c.l.b16 %v158
    %v230 = vunpack.c.l.b16 %v159
    %v231 = vunpack.c.l.b16 %v160
    %v232 = vunpack.c.l.b16 %v161
    %v233 = vpack.c.b16 %v202, %v201
    %v234 = vpack.c.b16 %v204, %v203
    %v235 = vpack.c.b16 %v206, %v205
    %v236 = vpack.c.b16 %v208, %v207
    %v237 = vpack.c.b16 %v210, %v209
    %v238 = vpack.c.b16 %v212, %v211
    %v239 = vpack.c.b16 %v214, %v213
    %v240 = vpack.c.b16 %v216, %v215
    %v241 = vpack.c.b16 %v218, %v217
    %v242 = vpack.c.b16 %v220, %v219
    %v243 = vpack.c.b16 %v222, %v221
    %v244 = vpack.c.b16 %v224, %v223
    %v245 = vpack.c.b16 %v226, %v225
    %v246 = vpack.c.b16 %v228, %v227
    %v247 = vpack.c.b16 %v230, %v229
    %v248 = vpack.c.b16 %v232, %v231
    %265 = vmatprep.subr.bf16.mxu0 0
    %266 = vmatpush1.bf16.msra.mxu0 %v233
    %267 = vmatprep.subr.bf16.mxu0 0
    %268 = vmatpush1.bf16.msra.mxu0 %v234
    %269 = vmatprep.subr.bf16.mxu0 0
    %270 = vmatpush1.bf16.msra.mxu0 %v235
    %271 = vmatprep.subr.bf16.mxu0 0
    %272 = vmatpush1.bf16.msra.mxu0 %v236
    %273 = vmatprep.subr.bf16.mxu0 0
    %274 = vmatpush1.bf16.msra.mxu0 %v237
    %275 = vmatprep.subr.bf16.mxu0 0
    %276 = vmatpush1.bf16.msra.mxu0 %v238
    %277 = vmatprep.subr.bf16.mxu0 0
    %278 = vmatpush1.bf16.msra.mxu0 %v239
    %279 = vmatprep.subr.bf16.mxu0 0
    %280 = vmatpush1.bf16.msra.mxu0 %v240
    %281 = vmatprep.subr.bf16.mxu0 0
    %282 = vmatpush1.bf16.msra.mxu0 %v241
    %283 = vmatprep.subr.bf16.mxu0 0
    %284 = vmatpush1.bf16.msra.mxu0 %v242
    %285 = vmatprep.subr.bf16.mxu0 0
    %286 = vmatpush1.bf16.msra.mxu0 %v243
    %287 = vmatprep.subr.bf16.mxu0 0
    %288 = vmatpush1.bf16.msra.mxu0 %v244
    %289 = vmatprep.subr.bf16.mxu0 0
    %290 = vmatpush1.bf16.msra.mxu0 %v245
    %291 = vmatprep.subr.bf16.mxu0 0
    %292 = vmatpush1.bf16.msra.mxu0 %v246
    %293 = vmatprep.subr.bf16.mxu0 0
    %294 = vmatpush1.bf16.msra.mxu0 %v247
    %295 = vmatprep.subr.bf16.mxu0 0
    %296 = vmatpush1.bf16.msra.mxu0 %v248
    %297 = vmatprep.mubr.bf16.mxu0 %v129
    %298 = vmatmul.mubr.bf16.gmra.mrb[0].mxu0 %v128
    %v299 = vpop.f32.mrb[0].mxu0
    %v300 = vadd.f32 %v167, %v299
    %v301 = vpop.f32.mrb[0].mxu0
    %v302 = vpop.f32.mrb[0].mxu0
    %v303 = vadd.f32 %v167, %v302
    %v304 = vpop.f32.mrb[0].mxu0
    %305 = vdwg.mxu0
    %v306 = vmax.f32 %v300, 0.0
    %v307 = vmax.f32 %v303, 0.0
    %v308 = vpack.c.bf16 %v307, %v306
    %v309 = vld [vmem:[%s5] sm:$0xf]
    %v310 = vld [vmem:[%s5 + $0x4] sm:$0xf]
    %v311 = vld [vmem:[%s5 + $0x8] sm:$0xf]
    %v312 = vld [vmem:[%s5 + $0xc] sm:$0xf]
    %v313 = vld [vmem:[%s5 + $0x10] sm:$0xf]
    %v314 = vld [vmem:[%s5 + $0x14] sm:$0xf]
    %v315 = vld [vmem:[%s5 + $0x18] sm:$0xf]
    %v316 = vld [vmem:[%s5 + $0x1c] sm:$0xf]
    %v317 = vld [vmem:[%s6] sm:$0x1]
    %v319 = vlaneseq
    %v320 = vshrl.u32 %v319, 7
    %v321 = vsub.s32 0, %v320
    %v322 = vrot.slane %v317, %v321
    %v332 = vunpack.c.l.b16 %v309
    %v333 = vunpack.c.l.b16 %v310
    %v334 = vunpack.c.l.b16 %v311
    %v335 = vunpack.c.l.b16 %v312
    %v336 = vunpack.c.l.b16 %v313
    %v337 = vunpack.c.l.b16 %v314
    %v338 = vunpack.c.l.b16 %v315
    %v339 = vunpack.c.l.b16 %v316
    %v340 = vpack.c.b16 %v333, %v332
    %v341 = vpack.c.b16 %v335, %v334
    %v342 = vpack.c.b16 %v337, %v336
    %v343 = vpack.c.b16 %v339, %v338
    %vm348 = vcmask 523264
    %v350 = vsel %vm348, %v308, 0
    %352 = vmatprep.subr.bf16.mxu0 0
    %353 = vmatpush1.bf16.msra.mxu0 %v340
    %354 = vmatprep.subr.bf16.mxu0 0
    %355 = vmatpush1.bf16.msra.mxu0 %v341
    %356 = vmatprep.subr.bf16.mxu0 0
    %357 = vmatpush1.bf16.msra.mxu0 %v342
    %358 = vmatprep.subr.bf16.mxu0 0
    %359 = vmatpush1.bf16.msra.mxu0 %v343
    %360 = vmatprep.subr.bf16.mxu0 0
    %361 = vmatpush1.bf16.msra.mxu0 0
    %362 = vmatprep.subr.bf16.mxu0 0
    %363 = vmatpush1.bf16.msra.mxu0 0
    %364 = vmatprep.subr.bf16.mxu0 0
    %365 = vmatpush1.bf16.msra.mxu0 0
    %366 = vmatprep.subr.bf16.mxu0 0
    %367 = vmatpush1.bf16.msra.mxu0 0
    %368 = vmatprep.subr.bf16.mxu0 0
    %369 = vmatpush1.bf16.msra.mxu0 0
    %370 = vmatprep.subr.bf16.mxu0 0
    %371 = vmatpush1.bf16.msra.mxu0 0
    %372 = vmatprep.subr.bf16.mxu0 0
    %373 = vmatpush1.bf16.msra.mxu0 0
    %374 = vmatprep.subr.bf16.mxu0 0
    %375 = vmatpush1.bf16.msra.mxu0 0
    %376 = vmatprep.subr.bf16.mxu0 0
    %377 = vmatpush1.bf16.msra.mxu0 0
    %378 = vmatprep.subr.bf16.mxu0 0
    %379 = vmatpush1.bf16.msra.mxu0 0
    %380 = vmatprep.subr.bf16.mxu0 0
    %381 = vmatpush1.bf16.msra.mxu0 0
    %382 = vmatprep.subr.bf16.mxu0 0
    %383 = vmatpush1.bf16.msra.mxu0 0
    %384 = vmatprep.mubr.bf16.mxu0 0
    %385 = vmatmul.mubr.bf16.gmra.mrb[0].mxu0 %v350
    %v386 = vpop.f32.mrb[0].mxu0
    %v387 = vadd.f32 %v322, %v386
    %v388 = vpop.f32.mrb[0].mxu0
    %v389 = vpop.f32.mrb[0].mxu0
    %v390 = vadd.f32 %v322, %v389
    %v391 = vpop.f32.mrb[0].mxu0
    %392 = vdwg.mxu0
    %v393 = vmax.f32 %v387, 0.0
    %v394 = vmax.f32 %v390, 0.0
    %v395 = vpack.c.bf16 %v394, %v393
    %v396 = vld [vmem:[%s7] sm:$0xf]
    %v397 = vld [vmem:[%s7 + $0x4] sm:$0xf]
    %v398 = vld [vmem:[%s7 + $0x8] sm:$0xf]
    %v399 = vld [vmem:[%s7 + $0xc] sm:$0xf]
    %v400 = vld [vmem:[%s8] sm:$0x1]
    %v402 = vlaneseq
    %v403 = vshrl.u32 %v402, 7
    %v404 = vsub.s32 0, %v403
    %v405 = vrot.slane %v400, %v404
    %v411 = vunpack.c.l.b16 %v396
    %v412 = vunpack.c.l.b16 %v397
    %v413 = vunpack.c.l.b16 %v398
    %v414 = vunpack.c.l.b16 %v399
    %v415 = vpack.c.b16 %v412, %v411
    %v416 = vpack.c.b16 %v414, %v413
    %v420 = vsel %vm77, %v395, 0
    %422 = vmatprep.subr.bf16.mxu0 0
    %423 = vmatpush1.bf16.msra.mxu0 %v415
    %424 = vmatprep.subr.bf16.mxu0 0
    %425 = vmatpush1.bf16.msra.mxu0 %v416
    %426 = vmatprep.subr.bf16.mxu0 0
    %427 = vmatpush1.bf16.msra.mxu0 0
    %428 = vmatprep.subr.bf16.mxu0 0
    %429 = vmatpush1.bf16.msra.mxu0 0
    %430 = vmatprep.subr.bf16.mxu0 0
    %431 = vmatpush1.bf16.msra.mxu0 0
    %432 = vmatprep.subr.bf16.mxu0 0
    %433 = vmatpush1.bf16.msra.mxu0 0
    %434 = vmatprep.subr.bf16.mxu0 0
    %435 = vmatpush1.bf16.msra.mxu0 0
    %436 = vmatprep.subr.bf16.mxu0 0
    %437 = vmatpush1.bf16.msra.mxu0 0
    %438 = vmatprep.subr.bf16.mxu0 0
    %439 = vmatpush1.bf16.msra.mxu0 0
    %440 = vmatprep.subr.bf16.mxu0 0
    %441 = vmatpush1.bf16.msra.mxu0 0
    %442 = vmatprep.subr.bf16.mxu0 0
    %443 = vmatpush1.bf16.msra.mxu0 0
    %444 = vmatprep.subr.bf16.mxu0 0
    %445 = vmatpush1.bf16.msra.mxu0 0
    %446 = vmatprep.subr.bf16.mxu0 0
    %447 = vmatpush1.bf16.msra.mxu0 0
    %448 = vmatprep.subr.bf16.mxu0 0
    %449 = vmatpush1.bf16.msra.mxu0 0
    %450 = vmatprep.subr.bf16.mxu0 0
    %451 = vmatpush1.bf16.msra.mxu0 0
    %452 = vmatprep.subr.bf16.mxu0 0
    %453 = vmatpush1.bf16.msra.mxu0 0
    %454 = vmatprep.mubr.bf16.mxu0 0
    %455 = vmatmul.mubr.bf16.gmra.mrb[0].mxu0 %v420
    %v456 = vpop.f32.mrb[0].mxu0
    %v457 = vadd.f32 %v405, %v456
    %v458 = vpop.f32.mrb[0].mxu0
    %v459 = vpop.f32.mrb[0].mxu0
    %v460 = vadd.f32 %v405, %v459
    %v461 = vpop.f32.mrb[0].mxu0
    %462 = vdwg.mxu0
    %463 = vst [vmem:[#allocation2] sm:$0xff] %v457
    %464 = vst [vmem:[#allocation2 + $0x8] sm:$0xff] %v460
    // Predicated region
    $region38: #{tpu_custom_call.1} parent=1 // pred_check
      _
    $region39: #{tpu_custom_call.1} parent=1 // pred_check_branch
      %466 = sbr.rel (0) target = $region41
    $region40: #{tpu_custom_call.1} parent=1 // pred_region
      %s468 = ssub.s32 256, 256
      %469 = vsyncadd [#allocation3], %s468
      %s470 = sshll.u32 [#allocation2], 4
      %s471 = int_to_ptr.vmem [resolvable:$true] %s470
      %476 = dma.vmem_to_hbm [thread:$0]  %s471, 256, %s9, [#allocation3], 128, 128, 8
    $region41: #{tpu_custom_call.1} parent=1 // pred_fallthru
      _
    // Predicated region
    $region42: #{tpu_custom_call.1} parent=1 // pred_check
      _
    $region43: #{tpu_custom_call.1} parent=1 // pred_check_branch
      %478 = sbr.rel (0) target = $region45
    $region44: #{tpu_custom_call.1} parent=1 // pred_region
      %479 = dma.done [#allocation3], 256
    $region45: #{tpu_custom_call.1} parent=1 // pred_fallthru
      _
    %480 = vsyncpa [#allocation3], 1

</llo_original>
